<compile_context>
chip_gen: v5e
topology: v5e:2x2
jax: 0.10.0
libtpu: 0.0.40
codegen_flags: <defaults>
</compile_context>

<pallas_src>
import functools

import jax
import jax.numpy as jnp
from jax.experimental import pallas as pl
from jax.experimental.pallas import tpu as pltpu


def _rmsnorm_kernel(x_ref, w_ref, o_ref, *, eps):
    # x_ref: (block_rows, H)   w_ref: (1, H)   o_ref: (block_rows, H)
    x = x_ref[...].astype(jnp.float32)                 # hidden_states.to(float32)
    var = jnp.mean(x * x, axis=-1, keepdims=True)      # pow(2).mean(-1, keepdim=True)
    scale = jax.lax.rsqrt(var + eps)                   # rsqrt(var + eps), one per row (EUP)
    w = w_ref[...].astype(o_ref.dtype)                 # (1, H) cast once per tile, cheap
    # Per element: 2 muls + 1 downcast (plus 1 mul + 1 add in the reduction).
    # Any garbage rows of a partial last block only poison their own row and
    # are masked away on writeback (reduction is strictly per-row).
    o_ref[...] = (x * scale).astype(o_ref.dtype) * w


def _round_up(x, m):
    return ((x + m - 1) // m) * m


def _tpu_generation():
    """Best-effort generation classification from the device kind string."""
    try:
        kind = jax.devices()[0].device_kind.lower()
    except Exception:
        return "unknown"
    # Single-TensorCore chips: v5e / v6e ("lite" variants).
    if any(t in kind for t in ("v5e", "v5 lite", "v5lite", "v6e", "v6 lite", "v6lite")):
        return "single_tc"
    # Two TensorCores visible to one Pallas program: v4 / v5p megacore, v7x.
    if any(t in kind for t in ("v7", "v4", "v5p")):
        return "multi_tc"
    return "unknown"


def _choose_block_rows(n_rows, hidden, itemsize, sublane, num_tc):
    """Sublane-aligned row tile sized for the HBM-bound roofline."""
    # ~4 MiB tiles: amortizes the ~0.35 us per-grid-step overhead even against
    # v7x's ~3.2 TB/s HBM; live VMEM (2x in + 2x out + fp32 temps) ~ 24 MiB.
    target_tile_bytes = 4 * 1024 * 1024
    br = target_tile_bytes // max(hidden * itemsize, 1)
    br = max(sublane, (br // sublane) * sublane)
    # Never bigger than the (sublane-rounded) row count: a single partial
    # block covers everything.
    br = min(br, _round_up(n_rows, sublane))
    if num_tc > 1:
        # 2-TC chips: ensure >= 2 steps (when worthwhile) and an even step
        # count so the "parallel" row axis load-balances across both cores.
        steps = pl.cdiv(n_rows, br)
        if steps == 1 and n_rows > 2 * sublane:
            steps = 2
        if steps > 1 and steps % 2:
            steps += 1
        br = max(sublane, _round_up(pl.cdiv(n_rows, steps), sublane))
    return br


def rmsnorm(x, weight, eps=1e-6, block_rows=None):
    """RMSNorm over the last axis of `x` using a Pallas TPU kernel.

    x:      (..., H) array
    weight: (H,)     scale parameter
    """
    orig_shape = x.shape
    H = orig_shape[-1]
    x2d = x.reshape(-1, H)
    R = x2d.shape[0]

    itemsize = jnp.dtype(x.dtype).itemsize
    # Sublane multiple for the second-minor axis: 8 (f32), 16 (bf16), 32 (int8).
    sublane = max(8, 32 // max(itemsize, 1))

    gen = _tpu_generation()
    num_tc = 2 if gen == "multi_tc" else 1

    if block_rows is None:
        br = _choose_block_rows(R, H, itemsize, sublane, num_tc)
    else:
        br = max(sublane, _round_up(int(block_rows), sublane))
        br = min(br, _round_up(R, sublane))

    # Ragged row counts are handled by a partial last block (no pad / slice):
    # Pallas masks out-of-bounds rows on writeback.
    grid = (pl.cdiv(R, br),)

    # Scoped-VMEM budget: 64 MiB on single-TC v5e/v6e (128 MiB physical),
    # 48 MiB otherwise (v7x has only 64 MiB physical; leave headroom).
    vmem_limit = (64 if gen == "single_tc" else 48) * 1024 * 1024

    w2d = weight.reshape(1, H)

    out = pl.pallas_call(
        functools.partial(_rmsnorm_kernel, eps=eps),
        out_shape=jax.ShapeDtypeStruct((R, H), x.dtype),
        grid_spec=pltpu.PrefetchScalarGridSpec(
            num_scalar_prefetch=0,
            grid=grid,
            in_specs=[
                pl.BlockSpec((br, H), lambda i: (i, 0)),
                pl.BlockSpec((1, H), lambda i: (0, 0)),   # weight stays resident
            ],
            out_specs=pl.BlockSpec((br, H), lambda i: (i, 0)),
        ),
        compiler_params=pltpu.CompilerParams(
            dimension_semantics=("parallel",),
            vmem_limit_bytes=vmem_limit,
        ),
    )(x2d, w2d)

    return out.reshape(orig_shape)


def rmsnorm_ref(x, weight, eps=1e-6):
    """Pure-JAX reference mirroring the PyTorch forward exactly."""
    input_dtype = x.dtype
    xf = x.astype(jnp.float32)
    var = jnp.mean(xf * xf, axis=-1, keepdims=True)
    xf = xf * jax.lax.rsqrt(var + eps)
    return (weight * xf.astype(input_dtype)).astype(input_dtype)


if __name__ == "__main__":
    key = jax.random.PRNGKey(0)
    kx, ky, kz = jax.random.split(key, 3)

    # Lane-aligned hidden size (multiple of 128) -> dense, unmasked stores.
    batch, seq, hidden = 2, 8, 256
    x = jax.random.normal(kx, (batch, seq, hidden), dtype=jnp.float32)

    # Deterministic parameter init (module __init__: weight = ones(hidden_size)).
    weight = jnp.ones((hidden,), dtype=jnp.float32)

    out = jax.block_until_ready(rmsnorm(x, weight, eps=1e-6))
    ref = rmsnorm_ref(x, weight, eps=1e-6)
    assert out.shape == x.shape
    assert out.dtype == x.dtype
    assert jnp.allclose(out, ref, atol=1e-5, rtol=1e-5), "mismatch vs reference"

    # Ragged row count (15 rows, not a multiple of 8) exercises the
    # partial-last-block path (no wrapper pad / slice).
    x2 = jax.random.normal(ky, (3, 5, hidden), dtype=jnp.float32)
    out2 = jax.block_until_ready(rmsnorm(x2, weight, eps=1e-6))
    ref2 = rmsnorm_ref(x2, weight, eps=1e-6)
    assert out2.shape == x2.shape
    assert jnp.allclose(out2, ref2, atol=1e-5, rtol=1e-5), "mismatch (ragged rows)"

    # bf16 activations + bf16 weight exercise the sublane=16 path.
    xb = jax.random.normal(kz, (2, 8, hidden), dtype=jnp.bfloat16)
    wb = jnp.ones((hidden,), dtype=jnp.bfloat16)
    outb = jax.block_until_ready(rmsnorm(xb, wb, eps=1e-6))
    refb = rmsnorm_ref(xb, wb, eps=1e-6)
    assert outb.dtype == jnp.bfloat16
    assert jnp.allclose(outb.astype(jnp.float32), refb.astype(jnp.float32),
                        atol=2e-2, rtol=2e-2), "mismatch (bf16)"

    print("KERNEL_OK")
</pallas_src>

<mosaic_0001>
module attributes {stable_mosaic.version = 11 : i64} {
  func.func @_rmsnorm_kernel(%arg0: i32, %arg1: memref<16x256xf32, #tpu.memory_space<vmem>>, %arg2: memref<1x256xf32, #tpu.memory_space<vmem>>, %arg3: memref<16x256xf32, #tpu.memory_space<vmem>>) attributes {dimension_semantics = [#tpu.dimension_semantics<parallel>], iteration_bounds = array<i64: 1>, scalar_prefetch = 0 : i64, scratch_operands = 0 : i64, tpu.core_type = #tpu.core_type<tc>, window_params = [{transform_indices = @transform_0, window_bounds = array<i64: 16, 256>}, {pipeline_mode = #tpu.pipeline_mode<synchronous>, transform_indices = @transform_1, window_bounds = array<i64: 1, 256>}, {transform_indices = @transform_2, window_bounds = array<i64: 16, 256>}]} {
    %c0 = arith.constant 0 : index
    %c0_0 = arith.constant 0 : index
    %0 = vector.load %arg1[%c0, %c0_0] : memref<16x256xf32, #tpu.memory_space<vmem>>, vector<16x256xf32>
    %1 = arith.mulf %0, %0 : vector<16x256xf32>
    %cst = arith.constant dense<0.000000e+00> : vector<16xf32>
    %2 = vector.multi_reduction <add>, %1, %cst [1] : vector<16x256xf32> to vector<16xf32>
    %3 = vector.shape_cast %2 : vector<16xf32> to vector<16x1xf32>
    %cst_1 = arith.constant 2.560000e+02 : f32
    %4 = vector.broadcast %cst_1 : f32 to vector<16x1xf32>
    %5 = arith.divf %3, %4 : vector<16x1xf32>
    %cst_2 = arith.constant 9.99999997E-7 : f32
    %6 = vector.broadcast %cst_2 : f32 to vector<16x1xf32>
    %7 = arith.addf %5, %6 : vector<16x1xf32>
    %8 = math.rsqrt %7 : vector<16x1xf32>
    %c0_3 = arith.constant 0 : index
    %c0_4 = arith.constant 0 : index
    %9 = vector.load %arg2[%c0_3, %c0_4] : memref<1x256xf32, #tpu.memory_space<vmem>>, vector<1x256xf32>
    %10 = vector.broadcast %8 : vector<16x1xf32> to vector<16x256xf32>
    %11 = arith.mulf %0, %10 : vector<16x256xf32>
    %12 = vector.broadcast %9 : vector<1x256xf32> to vector<16x256xf32>
    %13 = arith.mulf %11, %12 : vector<16x256xf32>
    %c0_5 = arith.constant 0 : index
    %c0_6 = arith.constant 0 : index
    %14 = vector.load %arg3[%c0_5, %c0_6] : memref<16x256xf32, #tpu.memory_space<vmem>>, vector<16x256xf32>
    tpu.vector_store %arg3[%c0_5, %c0_6], %13 {strides = array<i32>} : memref<16x256xf32, #tpu.memory_space<vmem>>, vector<16x256xf32>,
    return
  }
  func.func @transform_0(%arg0: i32) -> (i32, i32) {
    %c0_i32 = arith.constant 0 : i32
    %c0_i32_0 = arith.constant 0 : i32
    return %arg0, %c0_i32 : i32, i32
  }
  func.func @transform_1(%arg0: i32) -> (i32, i32) {
    %c0_i32 = arith.constant 0 : i32
    %c0_i32_0 = arith.constant 0 : i32
    %c0_i32_1 = arith.constant 0 : i32
    return %c0_i32, %c0_i32_0 : i32, i32
  }
  func.func @transform_2(%arg0: i32) -> (i32, i32) {
    %c0_i32 = arith.constant 0 : i32
    %c0_i32_0 = arith.constant 0 : i32
    return %arg0, %c0_i32 : i32, i32
  }
}

</mosaic_0001>

<llo_original>
// kernel: tpu_custom_call.1
$region0: #{tpu_custom_call.1}
  #allocation0 [shape = 'u32[]', space=smem, size = 0x4, offset = 0x4, fixed_abs, tag = 'smem constant byte address 0x4 - core index']
  #allocation1 [shape = 'u32[72,128]{1,0:T(1,128)}', space=vmem, size = 0x9000, scoped, tag = 'internal scratch']
  %s0 = inlined_call_operand.hbm [shape: f32[16,256], index: 0, kind: input, shape index: {}]
  %s1 = inlined_call_operand.hbm [shape: f32[1,256], index: 1, kind: input, shape index: {}]
  %s2 = inlined_call_operand.hbm [shape: f32[16,256], index: 2, kind: output, shape index: {}]
  %s3 = sld [smem:[#allocation0]]
  $region26: #{tpu_custom_call.1} parent=0
    _
  %s5 = ssub.s32 1, %s3
  %s6 = scalar_select 0, %s5, %s3
  $region1: #{tpu_custom_call.1} parent=0
    #allocation2 [shape = 'u8[16384]{0}', space=vmem, size = 0x4000, scoped, tag = 'input window, operand 0, single buffered']
    #allocation3 [shape = 's32[1]{0}', space=sflag, size = 0x4, scoped, tag = 'scoped memory for tpu_custom_call.1']
    #allocation4 [shape = 's32[1]{0}', space=sflag, size = 0x4, scoped, tag = 'scoped memory for tpu_custom_call.1']
    #allocation5 [shape = 'u8[1024]{0}', space=vmem, size = 0x400, scoped, tag = 'input window, operand 1, single buffered']
    #allocation6 [shape = 's32[1]{0}', space=sflag, size = 0x4, scoped, tag = 'scoped memory for tpu_custom_call.1']
    #allocation7 [shape = 'u8[16384]{0}', space=vmem, size = 0x4000, scoped, tag = 'output window, operand 0, single buffered']
    %7 = vsyncpa [#allocation3], 0
    %8 = vsyncpa [#allocation6], 0
    %9 = vsyncpa [#allocation4], 0
    // Predicated region
    $region2: #{tpu_custom_call.1} parent=1 // pred_check
      _
    $region3: #{tpu_custom_call.1} parent=1 // pred_check_branch
      %11 = sbr.rel (0) target = $region5
    $region4: #{tpu_custom_call.1} parent=1 // pred_region
      %13 = vsyncadd [#allocation3], 0
      %s14 = sshll.u32 %s0, 4
      %s15 = int_to_ptr.hbm [resolvable:$true] %s14
      %s16 = sshll.u32 [#allocation2], 4
      %s17 = int_to_ptr.vmem [resolvable:$true] %s16
      %22 = dma.hbm_to_vmem [thread:$0]  %s15, 512, %s17, [#allocation3], 256, 256, 16
    $region5: #{tpu_custom_call.1} parent=1 // pred_fallthru
      _
    // Predicated region
    $region6: #{tpu_custom_call.1} parent=1 // pred_check
      _
    $region7: #{tpu_custom_call.1} parent=1 // pred_check_branch
      %24 = sbr.rel (0) target = $region9
    $region8: #{tpu_custom_call.1} parent=1 // pred_region
      %26 = vsyncadd [#allocation6], 0
      %s28 = sshll.u32 %s1, 4
      %s29 = int_to_ptr.hbm [resolvable:$true] %s28
      %s30 = sshll.u32 [#allocation5], 4
      %s31 = int_to_ptr.vmem [resolvable:$true] %s30
      %33 = dma.hbm_to_vmem [thread:$0]  %s29, 32, %s31, [#allocation6]
    $region9: #{tpu_custom_call.1} parent=1 // pred_fallthru
      _
    // Predicated region
    $region10: #{tpu_custom_call.1} parent=1 // pred_check
      _
    $region11: #{tpu_custom_call.1} parent=1 // pred_check_branch
      %35 = sbr.rel (0) target = $region13
    $region12: #{tpu_custom_call.1} parent=1 // pred_region
      %37 = dma.done [#allocation3], 512
    $region13: #{tpu_custom_call.1} parent=1 // pred_fallthru
      _
    // Predicated region
    $region14: #{tpu_custom_call.1} parent=1 // pred_check
      _
    $region15: #{tpu_custom_call.1} parent=1 // pred_check_branch
      %39 = sbr.rel (0) target = $region17
    $region16: #{tpu_custom_call.1} parent=1 // pred_region
      %41 = dma.done [#allocation6], 32
    $region17: #{tpu_custom_call.1} parent=1 // pred_fallthru
      _
    %v42 = vld [vmem:[#allocation2] sm:$0xff]
    %v43 = vld [vmem:[#allocation2 + $0x8] sm:$0xff]
    %v44 = vld [vmem:[#allocation2 + $0x10] sm:$0xff]
    %v45 = vld [vmem:[#allocation2 + $0x18] sm:$0xff]
    %v46 = vmul.f32 %v42, %v42
    %v47 = vmul.f32 %v43, %v43
    %v48 = vmul.f32 %v44, %v44
    %v49 = vmul.f32 %v45, %v45
    %v50 = vadd.f32 %v46, %v47
    %51 = vadd.xlane.f32.xlu0 %v50
    %v52 = vpop.xlane.xlu0 %51
    %v53 = vadd.f32 %v48, %v49
    %54 = vadd.xlane.f32.xlu0 %v53
    %v55 = vpop.xlane.xlu0 %54
    %v56 = vrcp.pop 256.0
    %v57 = vmul.f32 256.0, %v56
    %v58 = vsub.f32 1.0, %v57
    %v59 = vmul.f32 %v56, %v58
    %v60 = vadd.f32 %v56, %v59
    %vm61 = vweird.f32 %v56
    %v62 = vsel %vm61, %v56, %v60
    %v63 = vmul.f32 %v52, %v62
    %v64 = vmul.f32 %v55, %v62
    %v65 = vadd.f32 %v63, 1e-06
    %v66 = vadd.f32 %v64, 1e-06
    %v67 = vrsqrt.pop %v65
    %v68 = vmul.f32 %v67, %v65
    %v69 = vmul.f32 %v68, %v67
    %v70 = vmul.f32 0.5, %v69
    %v71 = vsub.f32 1.5, %v70
    %v72 = vmul.f32 %v67, %v71
    %vm73 = vweird.f32 %v65
    %vm74 = vweird.f32 %v67
    %vm75 = vmor %vm73, %vm74
    %v76 = vsel %vm75, %v67, %v72
    %v77 = vrsqrt.pop %v66
    %v78 = vmul.f32 %v77, %v66
    %v79 = vmul.f32 %v78, %v77
    %v80 = vmul.f32 0.5, %v79
    %v81 = vsub.f32 1.5, %v80
    %v82 = vmul.f32 %v77, %v81
    %vm83 = vweird.f32 %v66
    %vm84 = vweird.f32 %v77
    %vm85 = vmor %vm83, %vm84
    %v86 = vsel %vm85, %v77, %v82
    %v87 = vld [vmem:[#allocation5] sm:$0x3]
    %v88 = vmul.f32 %v42, %v76
    %v89 = vmul.f32 %v43, %v76
    %v90 = vmul.f32 %v44, %v86
    %v91 = vmul.f32 %v45, %v86
    %v93 = vperm.slane %v87, 0
    %v94 = vperm.slane %v87, 1
    %v97 = vmul.f32 %v88, %v93
    %v98 = vmul.f32 %v89, %v94
    %v99 = vmul.f32 %v90, %v93
    %v100 = vmul.f32 %v91, %v94
    %101 = vst [vmem:[#allocation7] sm:$0xff] %v97
    %102 = vst [vmem:[#allocation7 + $0x8] sm:$0xff] %v98
    %103 = vst [vmem:[#allocation7 + $0x10] sm:$0xff] %v99
    %104 = vst [vmem:[#allocation7 + $0x18] sm:$0xff] %v100
    // Predicated region
    $region18: #{tpu_custom_call.1} parent=1 // pred_check
      _
    $region19: #{tpu_custom_call.1} parent=1 // pred_check_branch
      %106 = sbr.rel (0) target = $region21
    $region20: #{tpu_custom_call.1} parent=1 // pred_region
      %108 = vsyncadd [#allocation4], 0
      %s109 = sshll.u32 [#allocation7], 4
      %s110 = int_to_ptr.vmem [resolvable:$true] %s109
      %s111 = sshll.u32 %s2, 4
      %s112 = int_to_ptr.hbm [resolvable:$true] %s111
      %117 = dma.vmem_to_hbm [thread:$0]  %s110, 512, %s112, [#allocation4], 256, 256, 16
    $region21: #{tpu_custom_call.1} parent=1 // pred_fallthru
      _
    // Predicated region
    $region22: #{tpu_custom_call.1} parent=1 // pred_check
      _
    $region23: #{tpu_custom_call.1} parent=1 // pred_check_branch
      %119 = sbr.rel (0) target = $region25
    $region24: #{tpu_custom_call.1} parent=1 // pred_region
      %121 = dma.done [#allocation4], 512
    $region25: #{tpu_custom_call.1} parent=1 // pred_fallthru
      _
    %122 = vsyncpa [#allocation3], 1
    %123 = vsyncpa [#allocation6], 1
    %124 = vsyncpa [#allocation4], 1

</llo_original>
